<compile_context>
chip_gen: v6e
topology: v6e:2x2x1
jax: 0.10.0
libtpu: 0.0.40
codegen_flags: <defaults>
</compile_context>

<pallas_src>
import jax
import jax.numpy as jnp
from jax.experimental import pallas as pl
from jax.experimental.pallas import tpu as pltpu

# ----------------------------- model dims -----------------------------------
B = 2          # batch
C = 4          # input channels
H = W = 16     # spatial
PATCH = 4      # patch-embed window
NP = (H // PATCH) * (W // PATCH)     # 16 visual tokens per image
PATCH_DIM = PATCH * PATCH * C        # 64
D = 32         # shared vision/language hidden size
L = 8          # caption sequence length (MAX_QUERY_LEN stand-in)
VOCAB = 64     # toy vocabulary
FFN = 64       # language FFN hidden size
LANE = 128     # TPU lane width — every kernel operand/result is this wide

BNP = B * NP                 # 32 vision rows
BL = B * L                   # 16 language rows
OUT_ROWS = BNP + BL + BNP    # packed output slab: vis | lang | head  (80 rows)
W_ROWS = 3 * LANE + (LANE - BL)   # packed weight slab rows (496)
SCALE = 1.0 / (float(D) ** 0.5)


# ----------------------------- fused Pallas kernel ---------------------------
def _glip_fused_kernel(act_ref, w_ref, bias_ref, out_ref):
    f32 = jnp.float32
    # ---- unpack the 3 lane-dense slabs (static slices: zero runtime cost) ----
    x = act_ref[0:BNP, :]                 # (32,128) patch pixels, lanes >= PATCH_DIM are 0
    tok = act_ref[BNP:BNP + BL, :]        # (16,128) token+pos embeddings, lanes >= D are 0
    wp = w_ref[0:LANE, :]                 # (128,128) patch-embed W (rows<PATCH_DIM, cols<D)
    w1 = w_ref[LANE:2 * LANE, :]          # (128,128) FFN in    (rows<D,   cols<FFN)
    w2 = w_ref[2 * LANE:3 * LANE, :]      # (128,128) FFN out   (rows<FFN, cols<D)
    wh = w_ref[3 * LANE:W_ROWS, :]        # (112,128) head tail: rows 0..3 = wbox^T
    bp = bias_ref[0:1, :]                 # patch-embed bias   (lanes >= D are 0)
    b1 = bias_ref[1:2, :]                 # FFN bias 1         (lanes >= FFN are 0)
    b2 = bias_ref[2:3, :]                 # FFN bias 2
    g = bias_ref[3:4, :]                  # LayerNorm gamma    (lanes >= D are 0)
    beta = bias_ref[4:5, :]               # LayerNorm beta
    hb = bias_ref[5:6, :]                 # merged head bias: logit_bias | b_box | 0

    # ---- visual backbone: patch-embed matmul (Swin stand-in) ----
    vis = jnp.dot(x, wp, preferred_element_type=f32) + bp          # (32,128), lanes>=D are 0

    # ---- language backbone: GELU FFN + residual + LayerNorm (BERT stand-in) ----
    h = jax.nn.gelu(jnp.dot(tok, w1, preferred_element_type=f32) + b1, approximate=True)
    y = tok + jnp.dot(h, w2, preferred_element_type=f32) + b2      # (16,128), lanes>=D are 0
    mu = jnp.sum(y, axis=-1, keepdims=True) * (1.0 / D)            # padding lanes are exact 0
    lane = jax.lax.broadcasted_iota(jnp.int32, y.shape, 1)
    diff = jnp.where(lane < D, y - mu, 0.0)                        # mask padding out of var
    var = jnp.sum(diff * diff, axis=-1, keepdims=True) * (1.0 / D)
    lang = diff * jax.lax.rsqrt(var + 1e-5) * g + beta             # (16,128), lanes>=D are 0

    # ---- rpn / VLDyHead fusion: ONE MXU pass for grounded logits + bbox ----
    # RHS rows 0..15 = lang (pre-scaled copy only), rows 16..19 = wbox^T, rest 0.
    rhs = jnp.concatenate([lang * SCALE, wh], axis=0)              # (128,128), sublane-aligned
    head = jax.lax.dot_general(vis, rhs, (((1,), (1,)), ((), ())),
                               preferred_element_type=f32) + hb    # (32,128) lane-dense
    # head cols 0..15 = logits vs ALL B*L tokens (cross-batch block dropped in wrapper),
    # cols 16..19 = bbox deltas, rest 0.

    # ---- single packed output slab: 3 unmasked full-width row-block stores ----
    out_ref[0:BNP, :] = vis
    out_ref[BNP:BNP + BL, :] = lang
    out_ref[BNP + BL:OUT_ROWS, :] = head


def glip_fused(act, w_slab, bias_slab):
    inputs = (act, w_slab, bias_slab)
    return pl.pallas_call(
        _glip_fused_kernel,
        out_shape=jax.ShapeDtypeStruct((OUT_ROWS, LANE), jnp.float32),
        grid=(1,),
        in_specs=[pl.BlockSpec(a.shape, lambda i: (0, 0)) for a in inputs],
        out_specs=pl.BlockSpec((OUT_ROWS, LANE), lambda i: (0, 0)),
        # TODO(synk): at real dims add a leading "parallel" row-tile axis (v7x 2 TCs)
        #             and set vmem_limit_bytes explicitly for v7x's 64 MiB VMEM.
        compiler_params=pltpu.CompilerParams(dimension_semantics=("arbitrary",)),
    )(*inputs)


# ----------------------------- parameters ------------------------------------
def init_params(key):
    ks = jax.random.split(key, 10)
    s = 0.02
    return {
        # visual backbone (patch-embed stand-in)
        "w_patch": s * jax.random.normal(ks[0], (PATCH_DIM, D), jnp.float32),
        "b_patch": jnp.zeros((1, D), jnp.float32),
        # language backbone (BERT stand-in)
        "tok_emb": s * jax.random.normal(ks[1], (VOCAB, D), jnp.float32),
        "pos_emb": s * jax.random.normal(ks[2], (L, D), jnp.float32),
        "w1": s * jax.random.normal(ks[3], (D, FFN), jnp.float32),
        "b1": jnp.zeros((1, FFN), jnp.float32),
        "w2": s * jax.random.normal(ks[4], (FFN, D), jnp.float32),
        "b2": jnp.zeros((1, D), jnp.float32),
        "ln_g": jnp.ones((1, D), jnp.float32),
        "ln_b": jnp.zeros((1, D), jnp.float32),
        # rpn / fusion head
        "w_box": s * jax.random.normal(ks[5], (D, 4), jnp.float32),
        "b_box": jnp.zeros((1, 4), jnp.float32),
        "logit_bias": jnp.full((1, 1), -2.0, jnp.float32),
    }


def pack_params(params):
    """One-time packing of all weights/biases into lane-dense kernel slabs."""
    f32 = jnp.float32
    w_slab = jnp.zeros((W_ROWS, LANE), f32)
    w_slab = w_slab.at[0:PATCH_DIM, 0:D].set(params["w_patch"])
    w_slab = w_slab.at[LANE:LANE + D, 0:FFN].set(params["w1"])
    w_slab = w_slab.at[2 * LANE:2 * LANE + FFN, 0:D].set(params["w2"])
    w_slab = w_slab.at[3 * LANE:3 * LANE + 4, 0:D].set(params["w_box"].T)  # wbox^T

    bias_slab = jnp.zeros((8, LANE), f32)
    bias_slab = bias_slab.at[0, 0:D].set(params["b_patch"][0])
    bias_slab = bias_slab.at[1, 0:FFN].set(params["b1"][0])
    bias_slab = bias_slab.at[2, 0:D].set(params["b2"][0])
    bias_slab = bias_slab.at[3, 0:D].set(params["ln_g"][0])
    bias_slab = bias_slab.at[4, 0:D].set(params["ln_b"][0])
    bias_slab = bias_slab.at[5, 0:BL].set(params["logit_bias"][0, 0])   # logit bias lanes
    bias_slab = bias_slab.at[5, BL:BL + 4].set(params["b_box"][0])      # bbox bias lanes

    # pre-pad embedding tables so the per-call gather already yields 128 lanes
    tok_emb_pad = jnp.zeros((VOCAB, LANE), f32).at[:, :D].set(params["tok_emb"])
    pos_emb_pad = jnp.zeros((L, LANE), f32).at[:, :D].set(params["pos_emb"])
    return {"w_slab": w_slab, "bias_slab": bias_slab,
            "tok_emb_pad": tok_emb_pad, "pos_emb_pad": pos_emb_pad}


# ----------------------------- forward (wrapper) -----------------------------
@jax.jit
def glip_forward(images_nchw, input_ids, packed):
    b = images_nchw.shape[0]
    p = PATCH
    # NCHW -> non-overlapping PATCHxPATCH windows -> (B*NP, PATCH*PATCH*C).
    # TODO(synk): at real backbone resolutions fold this rearrangement into the
    #             kernel's index_map instead of materializing it in XLA.
    x = jnp.transpose(images_nchw, (0, 2, 3, 1))
    x = x.reshape(b, H // p, p, W // p, p, C)
    x = jnp.transpose(x, (0, 1, 3, 2, 4, 5)).reshape(b * NP, PATCH_DIM)
    x = x.astype(jnp.float32)

    # token + position embedding gather (glue; no on-device HF tokenizer)
    tok = (packed["tok_emb_pad"][input_ids] + packed["pos_emb_pad"][None]).reshape(b * L, LANE)

    # pack activations into one lane-dense slab: rows 0..31 = patches, 32..47 = tokens
    act = jnp.zeros((BNP + BL, LANE), jnp.float32)
    act = jax.lax.dynamic_update_slice(act, x, (0, 0))
    act = jax.lax.dynamic_update_slice(act, tok, (BNP, 0))

    out = glip_fused(act, packed["w_slab"], packed["bias_slab"])

    vis = out[0:BNP, :D].reshape(b, NP, D)
    lang = out[BNP:BNP + BL, :D].reshape(b, L, D)
    head = out[BNP + BL:OUT_ROWS, :]
    logits_all = head[:, :BL].reshape(b, NP, b, L)
    # keep only the batch-diagonal (vision batch grounded against its own caption)
    logits = jnp.stack([logits_all[i, :, i, :] for i in range(b)], axis=0)
    bbox = head[:, BL:BL + 4].reshape(b, NP, 4)
    return {"language_hidden": lang,
            "visual_features": vis,
            "logits": logits,
            "bbox_regression": bbox}


# ----------------------------- pure-JAX reference -----------------------------
def reference_forward(images_nchw, input_ids, params):
    b, c, h, w = images_nchw.shape
    p = PATCH
    x = jnp.transpose(images_nchw, (0, 2, 3, 1))
    x = x.reshape(b, h // p, p, w // p, p, c)
    x = jnp.transpose(x, (0, 1, 3, 2, 4, 5)).reshape(b, -1, p * p * c).astype(jnp.float32)
    vis = x @ params["w_patch"] + params["b_patch"]

    tok = params["tok_emb"][input_ids] + params["pos_emb"][None, :, :]
    hh = jax.nn.gelu(tok @ params["w1"] + params["b1"], approximate=True)
    y = tok + (hh @ params["w2"] + params["b2"])
    mu = jnp.mean(y, axis=-1, keepdims=True)
    var = jnp.mean((y - mu) ** 2, axis=-1, keepdims=True)
    lang = (y - mu) * jax.lax.rsqrt(var + 1e-5) * params["ln_g"] + params["ln_b"]

    logits = jnp.einsum("bpd,bld->bpl", vis, lang) * SCALE + params["logit_bias"][0, 0]
    bbox = vis @ params["w_box"] + params["b_box"]
    return {"language_hidden": lang, "visual_features": vis,
            "logits": logits, "bbox_regression": bbox}


# ----------------------------- main -------------------------------------------
if __name__ == "__main__":
    key = jax.random.PRNGKey(0)
    k_img, k_tok, k_par = jax.random.split(key, 3)

    images = jax.random.normal(k_img, (B, C, H, W), jnp.float32)        # NCHW
    input_ids = jax.random.randint(k_tok, (B, L), 0, VOCAB, jnp.int32)  # tokenized captions stand-in
    params = init_params(k_par)
    packed = pack_params(params)                                        # one-time packing

    out = glip_forward(images, input_ids, packed)
    jax.block_until_ready(out)

    ref = reference_forward(images, input_ids, params)
    for name in ("visual_features", "language_hidden", "logits", "bbox_regression"):
        assert jnp.allclose(out[name], ref[name], atol=1e-4, rtol=1e-4), name

    print("KERNEL_OK")
</pallas_src>

<mosaic_0001>
module attributes {stable_mosaic.version = 11 : i64} {
  func.func @_glip_fused_kernel(%arg0: i32, %arg1: memref<48x128xf32, #tpu.memory_space<vmem>>, %arg2: memref<496x128xf32, #tpu.memory_space<vmem>>, %arg3: memref<8x128xf32, #tpu.memory_space<vmem>>, %arg4: memref<80x128xf32, #tpu.memory_space<vmem>>) attributes {dimension_semantics = [#tpu.dimension_semantics<arbitrary>], iteration_bounds = array<i64: 1>, scalar_prefetch = 0 : i64, scratch_operands = 0 : i64, tpu.core_type = #tpu.core_type<tc>, window_params = [{pipeline_mode = #tpu.pipeline_mode<synchronous>, transform_indices = @transform_0, window_bounds = array<i64: 48, 128>}, {pipeline_mode = #tpu.pipeline_mode<synchronous>, transform_indices = @transform_1, window_bounds = array<i64: 496, 128>}, {pipeline_mode = #tpu.pipeline_mode<synchronous>, transform_indices = @transform_2, window_bounds = array<i64: 8, 128>}, {pipeline_mode = #tpu.pipeline_mode<synchronous>, transform_indices = @transform_3, window_bounds = array<i64: 80, 128>}]} {
    %c0 = arith.constant 0 : index
    %c0_0 = arith.constant 0 : index
    %0 = vector.load %arg1[%c0, %c0_0] : memref<48x128xf32, #tpu.memory_space<vmem>>, vector<32x128xf32>
    %c32 = arith.constant 32 : index
    %c0_1 = arith.constant 0 : index
    %1 = vector.load %arg1[%c32, %c0_1] : memref<48x128xf32, #tpu.memory_space<vmem>>, vector<16x128xf32>
    %c0_2 = arith.constant 0 : index
    %c0_3 = arith.constant 0 : index
    %2 = vector.load %arg2[%c0_2, %c0_3] : memref<496x128xf32, #tpu.memory_space<vmem>>, vector<128x128xf32>
    %c128 = arith.constant 128 : index
    %c0_4 = arith.constant 0 : index
    %3 = vector.load %arg2[%c128, %c0_4] : memref<496x128xf32, #tpu.memory_space<vmem>>, vector<128x128xf32>
    %c256 = arith.constant 256 : index
    %c0_5 = arith.constant 0 : index
    %4 = vector.load %arg2[%c256, %c0_5] : memref<496x128xf32, #tpu.memory_space<vmem>>, vector<128x128xf32>
    %c384 = arith.constant 384 : index
    %c0_6 = arith.constant 0 : index
    %5 = vector.load %arg2[%c384, %c0_6] : memref<496x128xf32, #tpu.memory_space<vmem>>, vector<112x128xf32>
    %c0_7 = arith.constant 0 : index
    %c0_8 = arith.constant 0 : index
    %6 = vector.load %arg3[%c0_7, %c0_8] : memref<8x128xf32, #tpu.memory_space<vmem>>, vector<1x128xf32>
    %c1 = arith.constant 1 : index
    %c0_9 = arith.constant 0 : index
    %7 = vector.load %arg3[%c1, %c0_9] : memref<8x128xf32, #tpu.memory_space<vmem>>, vector<1x128xf32>
    %c2 = arith.constant 2 : index
    %c0_10 = arith.constant 0 : index
    %8 = vector.load %arg3[%c2, %c0_10] : memref<8x128xf32, #tpu.memory_space<vmem>>, vector<1x128xf32>
    %c3 = arith.constant 3 : index
    %c0_11 = arith.constant 0 : index
    %9 = vector.load %arg3[%c3, %c0_11] : memref<8x128xf32, #tpu.memory_space<vmem>>, vector<1x128xf32>
    %c4 = arith.constant 4 : index
    %c0_12 = arith.constant 0 : index
    %10 = vector.load %arg3[%c4, %c0_12] : memref<8x128xf32, #tpu.memory_space<vmem>>, vector<1x128xf32>
    %c5 = arith.constant 5 : index
    %c0_13 = arith.constant 0 : index
    %11 = vector.load %arg3[%c5, %c0_13] : memref<8x128xf32, #tpu.memory_space<vmem>>, vector<1x128xf32>
    %cst = arith.constant dense<0.000000e+00> : vector<32x128xf32>
    %12 = tpu.matmul %0, %2, %cst {dimension_numbers = #tpu.dot_dimension_numbers<[1], [0], [0], [1], [0, 0, 1, 1], [], []>} : vector<32x128xf32>, vector<128x128xf32>, vector<32x128xf32> -> vector<32x128xf32>
    %13 = vector.broadcast %6 : vector<1x128xf32> to vector<32x128xf32>
    %14 = arith.addf %12, %13 : vector<32x128xf32>
    %cst_14 = arith.constant dense<0.000000e+00> : vector<16x128xf32>
    %15 = tpu.matmul %1, %3, %cst_14 {dimension_numbers = #tpu.dot_dimension_numbers<[1], [0], [0], [1], [0, 0, 1, 1], [], []>} : vector<16x128xf32>, vector<128x128xf32>, vector<16x128xf32> -> vector<16x128xf32>
    %16 = vector.broadcast %7 : vector<1x128xf32> to vector<16x128xf32>
    %17 = arith.addf %15, %16 : vector<16x128xf32>
    %18 = arith.mulf %17, %17 : vector<16x128xf32>
    %19 = arith.mulf %17, %18 : vector<16x128xf32>
    %cst_15 = arith.constant 4.471500e-02 : f32
    %20 = vector.broadcast %cst_15 : f32 to vector<16x128xf32>
    %21 = arith.mulf %20, %19 : vector<16x128xf32>
    %22 = arith.addf %17, %21 : vector<16x128xf32>
    %cst_16 = arith.constant 0.797884583 : f32
    %23 = vector.broadcast %cst_16 : f32 to vector<16x128xf32>
    %24 = arith.mulf %23, %22 : vector<16x128xf32>
    %25 = math.tanh %24 : vector<16x128xf32>
    %cst_17 = arith.constant 1.000000e+00 : f32
    %26 = vector.broadcast %cst_17 : f32 to vector<16x128xf32>
    %27 = arith.addf %26, %25 : vector<16x128xf32>
    %cst_18 = arith.constant 5.000000e-01 : f32
    %28 = vector.broadcast %cst_18 : f32 to vector<16x128xf32>
    %29 = arith.mulf %28, %27 : vector<16x128xf32>
    %30 = arith.mulf %17, %29 : vector<16x128xf32>
    %cst_19 = arith.constant dense<0.000000e+00> : vector<16x128xf32>
    %31 = tpu.matmul %30, %4, %cst_19 {dimension_numbers = #tpu.dot_dimension_numbers<[1], [0], [0], [1], [0, 0, 1, 1], [], []>} : vector<16x128xf32>, vector<128x128xf32>, vector<16x128xf32> -> vector<16x128xf32>
    %32 = arith.addf %1, %31 : vector<16x128xf32>
    %33 = vector.broadcast %8 : vector<1x128xf32> to vector<16x128xf32>
    %34 = arith.addf %32, %33 : vector<16x128xf32>
    %cst_20 = arith.constant dense<0.000000e+00> : vector<16xf32>
    %35 = vector.multi_reduction <add>, %34, %cst_20 [1] : vector<16x128xf32> to vector<16xf32>
    %36 = vector.shape_cast %35 : vector<16xf32> to vector<16x1xf32>
    %cst_21 = arith.constant 3.125000e-02 : f32
    %37 = vector.broadcast %cst_21 : f32 to vector<16x1xf32>
    %38 = arith.mulf %36, %37 : vector<16x1xf32>
    %39 = tpu.iota {dimensions = array<i32: 1>} : vector<16x128xi32>
    %c32_i32 = arith.constant 32 : i32
    %40 = vector.broadcast %c32_i32 : i32 to vector<16x128xi32>
    %41 = arith.cmpi slt, %39, %40 : vector<16x128xi32>
    %42 = vector.broadcast %38 : vector<16x1xf32> to vector<16x128xf32>
    %43 = arith.subf %34, %42 : vector<16x128xf32>
    %cst_22 = arith.constant 0.000000e+00 : f32
    %44 = vector.broadcast %cst_22 : f32 to vector<16x128xf32>
    %45 = arith.select %41, %43, %44 : vector<16x128xi1>, vector<16x128xf32>
    %46 = arith.mulf %45, %45 : vector<16x128xf32>
    %cst_23 = arith.constant dense<0.000000e+00> : vector<16xf32>
    %47 = vector.multi_reduction <add>, %46, %cst_23 [1] : vector<16x128xf32> to vector<16xf32>
    %48 = vector.shape_cast %47 : vector<16xf32> to vector<16x1xf32>
    %cst_24 = arith.constant 3.125000e-02 : f32
    %49 = vector.broadcast %cst_24 : f32 to vector<16x1xf32>
    %50 = arith.mulf %48, %49 : vector<16x1xf32>
    %cst_25 = arith.constant 9.99999974E-6 : f32
    %51 = vector.broadcast %cst_25 : f32 to vector<16x1xf32>
    %52 = arith.addf %50, %51 : vector<16x1xf32>
    %53 = math.rsqrt %52 : vector<16x1xf32>
    %54 = vector.broadcast %53 : vector<16x1xf32> to vector<16x128xf32>
    %55 = arith.mulf %45, %54 : vector<16x128xf32>
    %56 = vector.broadcast %9 : vector<1x128xf32> to vector<16x128xf32>
    %57 = arith.mulf %55, %56 : vector<16x128xf32>
    %58 = vector.broadcast %10 : vector<1x128xf32> to vector<16x128xf32>
    %59 = arith.addf %57, %58 : vector<16x128xf32>
    %cst_26 = arith.constant 0.176776692 : f32
    %60 = vector.broadcast %cst_26 : f32 to vector<16x128xf32>
    %61 = arith.mulf %59, %60 : vector<16x128xf32>
    %62 = tpu.concatenate %61, %5 in 0 : vector<16x128xf32>, vector<112x128xf32> -> vector<128x128xf32>
    %cst_27 = arith.constant dense<0.000000e+00> : vector<32x128xf32>
    %63 = tpu.matmul %14, %62, %cst_27 {dimension_numbers = #tpu.dot_dimension_numbers<[1], [1], [0], [0], [0, 0, 1, 0], [], []>} : vector<32x128xf32>, vector<128x128xf32>, vector<32x128xf32> -> vector<32x128xf32>
    %64 = vector.broadcast %11 : vector<1x128xf32> to vector<32x128xf32>
    %65 = arith.addf %63, %64 : vector<32x128xf32>
    %c0_28 = arith.constant 0 : index
    %c0_29 = arith.constant 0 : index
    %66 = vector.load %arg4[%c0_28, %c0_29] : memref<80x128xf32, #tpu.memory_space<vmem>>, vector<32x128xf32>
    tpu.vector_store %arg4[%c0_28, %c0_29], %14 {strides = array<i32>} : memref<80x128xf32, #tpu.memory_space<vmem>>, vector<32x128xf32>,
    %c32_30 = arith.constant 32 : index
    %c0_31 = arith.constant 0 : index
    %67 = vector.load %arg4[%c32_30, %c0_31] : memref<80x128xf32, #tpu.memory_space<vmem>>, vector<16x128xf32>
    tpu.vector_store %arg4[%c32_30, %c0_31], %59 {strides = array<i32>} : memref<80x128xf32, #tpu.memory_space<vmem>>, vector<16x128xf32>,
    %c48 = arith.constant 48 : index
    %c0_32 = arith.constant 0 : index
    %68 = vector.load %arg4[%c48, %c0_32] : memref<80x128xf32, #tpu.memory_space<vmem>>, vector<32x128xf32>
    tpu.vector_store %arg4[%c48, %c0_32], %65 {strides = array<i32>} : memref<80x128xf32, #tpu.memory_space<vmem>>, vector<32x128xf32>,
    return
  }
  func.func @transform_0(%arg0: i32) -> (i32, i32) {
    %c0_i32 = arith.constant 0 : i32
    %c0_i32_0 = arith.constant 0 : i32
    %c0_i32_1 = arith.constant 0 : i32
    return %c0_i32, %c0_i32_0 : i32, i32
  }
  func.func @transform_1(%arg0: i32) -> (i32, i32) {
    %c0_i32 = arith.constant 0 : i32
    %c0_i32_0 = arith.constant 0 : i32
    %c0_i32_1 = arith.constant 0 : i32
    return %c0_i32, %c0_i32_0 : i32, i32
  }
  func.func @transform_2(%arg0: i32) -> (i32, i32) {
    %c0_i32 = arith.constant 0 : i32
    %c0_i32_0 = arith.constant 0 : i32
    %c0_i32_1 = arith.constant 0 : i32
    return %c0_i32, %c0_i32_0 : i32, i32
  }
  func.func @transform_3(%arg0: i32) -> (i32, i32) {
    %c0_i32 = arith.constant 0 : i32
    %c0_i32_0 = arith.constant 0 : i32
    %c0_i32_1 = arith.constant 0 : i32
    return %c0_i32, %c0_i32_0 : i32, i32
  }
}

</mosaic_0001>

<llo_original>
// kernel: glip_forward.1
$region0: #{glip_forward.1}
  #allocation0 [shape = 'u32[]', space=smem, size = 0x4, offset = 0x4, fixed_abs, tag = 'smem constant byte address 0x4 - core index']
  #allocation1 [shape = 'u32[144,128]{1,0:T(1,128)}', space=vmem, size = 0x12000, scoped, tag = 'internal scratch']
  %s0 = inlined_call_operand.vmem [shape: f32[48,128], index: 0, kind: input, shape index: {}]
  %s1 = inlined_call_operand.vmem [shape: f32[496,128], index: 1, kind: input, shape index: {}]
  %s2 = inlined_call_operand.vmem [shape: f32[8,128], index: 2, kind: input, shape index: {}]
  %s3 = inlined_call_operand.vmem [shape: f32[80,128], index: 3, kind: output, shape index: {}]
  %s4 = sld [smem:[#allocation0]]
  $region22: #{glip_forward.1} parent=0
    _
  %s6 = ssub.s32 1, %s4
  %s7 = scalar_select 0, %s6, %s4
  // Predicated region
  $region2: #{glip_forward.1} parent=0 // pred_check
    _
  $region3: #{glip_forward.1} parent=0 // pred_check_branch
    %9 = sbr.rel (0) target = $region5
  $region4: #{glip_forward.1} parent=0 // pred_region
    _
  $region5: #{glip_forward.1} parent=0 // pred_fallthru
    _
  // Predicated region
  $region6: #{glip_forward.1} parent=0 // pred_check
    _
  $region7: #{glip_forward.1} parent=0 // pred_check_branch
    %11 = sbr.rel (0) target = $region9
  $region8: #{glip_forward.1} parent=0 // pred_region
    _
  $region9: #{glip_forward.1} parent=0 // pred_fallthru
    _
  // Predicated region
  $region10: #{glip_forward.1} parent=0 // pred_check
    _
  $region11: #{glip_forward.1} parent=0 // pred_check_branch
    %13 = sbr.rel (0) target = $region13
  $region12: #{glip_forward.1} parent=0 // pred_region
    _
  $region13: #{glip_forward.1} parent=0 // pred_fallthru
    _
  %v14 = vld [vmem:[%s0] sm:$0xff]
  %v15 = vld [vmem:[%s0 + $0x8] sm:$0xff]
  %v16 = vld [vmem:[%s0 + $0x10] sm:$0xff]
  %v17 = vld [vmem:[%s0 + $0x18] sm:$0xff]
  %v18 = vld [vmem:[%s0 + $0x20] sm:$0xff]
  %v19 = vld [vmem:[%s0 + $0x28] sm:$0xff]
  %v20 = vld [vmem:[%s1] sm:$0xff]
  %v21 = vld [vmem:[%s1 + $0x8] sm:$0xff]
  %v22 = vld [vmem:[%s1 + $0x10] sm:$0xff]
  %v23 = vld [vmem:[%s1 + $0x18] sm:$0xff]
  %v24 = vld [vmem:[%s1 + $0x20] sm:$0xff]
  %v25 = vld [vmem:[%s1 + $0x28] sm:$0xff]
  %v26 = vld [vmem:[%s1 + $0x30] sm:$0xff]
  %v27 = vld [vmem:[%s1 + $0x38] sm:$0xff]
  %v28 = vld [vmem:[%s1 + $0x40] sm:$0xff]
  %v29 = vld [vmem:[%s1 + $0x48] sm:$0xff]
  %v30 = vld [vmem:[%s1 + $0x50] sm:$0xff]
  %v31 = vld [vmem:[%s1 + $0x58] sm:$0xff]
  %v32 = vld [vmem:[%s1 + $0x60] sm:$0xff]
  %v33 = vld [vmem:[%s1 + $0x68] sm:$0xff]
  %v34 = vld [vmem:[%s1 + $0x70] sm:$0xff]
  %v35 = vld [vmem:[%s1 + $0x78] sm:$0xff]
  %v36 = vld [vmem:[%s1 + $0x80] sm:$0xff]
  %v37 = vld [vmem:[%s1 + $0x88] sm:$0xff]
  %v38 = vld [vmem:[%s1 + $0x90] sm:$0xff]
  %v39 = vld [vmem:[%s1 + $0x98] sm:$0xff]
  %v40 = vld [vmem:[%s1 + $0xa0] sm:$0xff]
  %v41 = vld [vmem:[%s1 + $0xa8] sm:$0xff]
  %v42 = vld [vmem:[%s1 + $0xb0] sm:$0xff]
  %v43 = vld [vmem:[%s1 + $0xb8] sm:$0xff]
  %v44 = vld [vmem:[%s1 + $0xc0] sm:$0xff]
  %v45 = vld [vmem:[%s1 + $0xc8] sm:$0xff]
  %v46 = vld [vmem:[%s1 + $0xd0] sm:$0xff]
  %v47 = vld [vmem:[%s1 + $0xd8] sm:$0xff]
  %v48 = vld [vmem:[%s1 + $0xe0] sm:$0xff]
  %v49 = vld [vmem:[%s1 + $0xe8] sm:$0xff]
  %v50 = vld [vmem:[%s1 + $0xf0] sm:$0xff]
  %v51 = vld [vmem:[%s1 + $0xf8] sm:$0xff]
  %v52 = vld [vmem:[%s1 + $0x100] sm:$0xff]
  %v53 = vld [vmem:[%s1 + $0x108] sm:$0xff]
  %v54 = vld [vmem:[%s1 + $0x110] sm:$0xff]
  %v55 = vld [vmem:[%s1 + $0x118] sm:$0xff]
  %v56 = vld [vmem:[%s1 + $0x120] sm:$0xff]
  %v57 = vld [vmem:[%s1 + $0x128] sm:$0xff]
  %v58 = vld [vmem:[%s1 + $0x130] sm:$0xff]
  %v59 = vld [vmem:[%s1 + $0x138] sm:$0xff]
  %v60 = vld [vmem:[%s1 + $0x140] sm:$0xff]
  %v61 = vld [vmem:[%s1 + $0x148] sm:$0xff]
  %v62 = vld [vmem:[%s1 + $0x150] sm:$0xff]
  %v63 = vld [vmem:[%s1 + $0x158] sm:$0xff]
  %v64 = vld [vmem:[%s1 + $0x160] sm:$0xff]
  %v65 = vld [vmem:[%s1 + $0x168] sm:$0xff]
  %v66 = vld [vmem:[%s1 + $0x170] sm:$0xff]
  %v67 = vld [vmem:[%s1 + $0x178] sm:$0xff]
  %v68 = vld [vmem:[%s1 + $0x180] sm:$0xff]
  %v69 = vld [vmem:[%s1 + $0x188] sm:$0xff]
  %v70 = vld [vmem:[%s1 + $0x190] sm:$0xff]
  %v71 = vld [vmem:[%s1 + $0x198] sm:$0xff]
  %v72 = vld [vmem:[%s1 + $0x1a0] sm:$0xff]
  %v73 = vld [vmem:[%s1 + $0x1a8] sm:$0xff]
  %v74 = vld [vmem:[%s1 + $0x1b0] sm:$0xff]
  %v75 = vld [vmem:[%s1 + $0x1b8] sm:$0xff]
  %v76 = vld [vmem:[%s1 + $0x1c0] sm:$0xff]
  %v77 = vld [vmem:[%s1 + $0x1c8] sm:$0xff]
  %v78 = vld [vmem:[%s1 + $0x1d0] sm:$0xff]
  %v79 = vld [vmem:[%s1 + $0x1d8] sm:$0xff]
  %v80 = vld [vmem:[%s1 + $0x1e0] sm:$0xff]
  %v81 = vld [vmem:[%s1 + $0x1e8] sm:$0xff]
  %v82 = vld [vmem:[%s2] sm:$0x1]
  %v83 = vld [vmem:[%s2 + $0x1] sm:$0x1]
  %v84 = vld [vmem:[%s2 + $0x2] sm:$0x1]
  %v85 = vld [vmem:[%s2 + $0x3] sm:$0x1]
  %v86 = vld [vmem:[%s2 + $0x4] sm:$0x1]
  %v87 = vld [vmem:[%s2 + $0x5] sm:$0x1]
  %v88 = vlaneseq
  %v89 = vshrl.u32 %v88, 7
  %v90 = vsub.s32 0, %v89
  %v91 = vrot.slane %v82, %v90
  %92 = vmatprep.subr.mxu0 0.0
  %93 = vmatpush1.msra.mxu0 %v35
  %94 = vmatprep.subr.mxu0 0.0
  %95 = vmatpush1.msra.mxu0 %v34
  %96 = vmatprep.subr.mxu0 0.0
  %97 = vmatpush1.msra.mxu0 %v33
  %98 = vmatprep.subr.mxu0 0.0
  %99 = vmatpush1.msra.mxu0 %v32
  %100 = vmatprep.subr.mxu0 0.0
  %101 = vmatpush1.msra.mxu0 %v31
  %102 = vmatprep.subr.mxu0 0.0
  %103 = vmatpush1.msra.mxu0 %v30
  %104 = vmatprep.subr.mxu0 0.0
  %105 = vmatpush1.msra.mxu0 %v29
  %106 = vmatprep.subr.mxu0 0.0
  %107 = vmatpush1.msra.mxu0 %v28
  %108 = vmatprep.subr.mxu0 0.0
  %109 = vmatpush1.msra.mxu0 %v27
  %110 = vmatprep.subr.mxu0 0.0
  %111 = vmatpush1.msra.mxu0 %v26
  %112 = vmatprep.subr.mxu0 0.0
  %113 = vmatpush1.msra.mxu0 %v25
  %114 = vmatprep.subr.mxu0 0.0
  %115 = vmatpush1.msra.mxu0 %v24
  %116 = vmatprep.subr.mxu0 0.0
  %117 = vmatpush1.msra.mxu0 %v23
  %118 = vmatprep.subr.mxu0 0.0
  %119 = vmatpush1.msra.mxu0 %v22
  %120 = vmatprep.subr.mxu0 0.0
  %121 = vmatpush1.msra.mxu0 %v21
  %122 = vmatprep.subr.mxu0 0.0
  %123 = vmatpush1.msra.mxu0 %v20
  %124 = vmatprep.subr.mxu0 0.0
  %125 = vmatpush2.msra.mxu0 0.0
  %126 = vmatprep.subr.mxu0 0.0
  %127 = vmatpush2.msra.mxu0 0.0
  %128 = vmatprep.subr.mxu0 0.0
  %129 = vmatpush2.msra.mxu0 0.0
  %130 = vmatprep.subr.mxu0 0.0
  %131 = vmatpush2.msra.mxu0 0.0
  %132 = vmatprep.subr.mxu0 0.0
  %133 = vmatpush2.msra.mxu0 0.0
  %134 = vmatprep.subr.mxu0 0.0
  %135 = vmatpush2.msra.mxu0 0.0
  %136 = vmatprep.subr.mxu0 0.0
  %137 = vmatpush2.msra.mxu0 0.0
  %138 = vmatprep.subr.mxu0 0.0
  %139 = vmatpush2.msra.mxu0 0.0
  %140 = vmatprep.subr.mxu0 0.0
  %141 = vmatpush2.msra.mxu0 0.0
  %142 = vmatprep.subr.mxu0 0.0
  %143 = vmatpush2.msra.mxu0 0.0
  %144 = vmatprep.subr.mxu0 0.0
  %145 = vmatpush2.msra.mxu0 0.0
  %146 = vmatprep.subr.mxu0 0.0
  %147 = vmatpush2.msra.mxu0 0.0
  %148 = vmatprep.subr.mxu0 0.0
  %149 = vmatpush2.msra.mxu0 0.0
  %150 = vmatprep.subr.mxu0 0.0
  %151 = vmatpush2.msra.mxu0 0.0
  %152 = vmatprep.subr.mxu0 0.0
  %153 = vmatpush2.msra.mxu0 0.0
  %154 = vmatprep.subr.mxu0 0.0
  %155 = vmatpush2.msra.mxu0 0.0
  %156 = vmatprep.mubr.f32.mxu0 0.0
  %157 = vmatmul.mubr.f32.gmra.mxu0 %v14
  %v158 = vpop.f32.mrf.mxu0
  %v159 = vadd.f32 %v91, %v158
  %v160 = vpop.f32.mrf.mxu0
  %161 = vmatprep.mubr.f32.mxu0 0.0
  %162 = vmatmul.mubr.f32.gmra.mxu0 %v15
  %v163 = vpop.f32.mrf.mxu0
  %v164 = vadd.f32 %v91, %v163
  %v165 = vpop.f32.mrf.mxu0
  %166 = vmatprep.mubr.f32.mxu0 0.0
  %167 = vmatmul.mubr.f32.gmra.mxu0 %v16
  %v168 = vpop.f32.mrf.mxu0
  %v169 = vadd.f32 %v91, %v168
  %v170 = vpop.f32.mrf.mxu0
  %171 = vmatprep.mubr.f32.mxu0 0.0
  %172 = vmatmul.mubr.f32.gmra.mxu0 %v17
  %v173 = vpop.f32.mrf.mxu0
  %v174 = vadd.f32 %v91, %v173
  %v175 = vpop.f32.mrf.mxu0
  %176 = vdwg.mxu0
  %v177 = vlaneseq
  %v178 = vshrl.u32 %v177, 7
  %v179 = vsub.s32 0, %v178
  %v180 = vrot.slane %v83, %v179
  %181 = vmatprep.subr.mxu0 0.0
  %182 = vmatpush1.msra.mxu0 %v51
  %183 = vmatprep.subr.mxu0 0.0
  %184 = vmatpush1.msra.mxu0 %v50
  %185 = vmatprep.subr.mxu0 0.0
  %186 = vmatpush1.msra.mxu0 %v49
  %187 = vmatprep.subr.mxu0 0.0
  %188 = vmatpush1.msra.mxu0 %v48
  %189 = vmatprep.subr.mxu0 0.0
  %190 = vmatpush1.msra.mxu0 %v47
  %191 = vmatprep.subr.mxu0 0.0
  %192 = vmatpush1.msra.mxu0 %v46
  %193 = vmatprep.subr.mxu0 0.0
  %194 = vmatpush1.msra.mxu0 %v45
  %195 = vmatprep.subr.mxu0 0.0
  %196 = vmatpush1.msra.mxu0 %v44
  %197 = vmatprep.subr.mxu0 0.0
  %198 = vmatpush1.msra.mxu0 %v43
  %199 = vmatprep.subr.mxu0 0.0
  %200 = vmatpush1.msra.mxu0 %v42
  %201 = vmatprep.subr.mxu0 0.0
  %202 = vmatpush1.msra.mxu0 %v41
  %203 = vmatprep.subr.mxu0 0.0
  %204 = vmatpush1.msra.mxu0 %v40
  %205 = vmatprep.subr.mxu0 0.0
  %206 = vmatpush1.msra.mxu0 %v39
  %207 = vmatprep.subr.mxu0 0.0
  %208 = vmatpush1.msra.mxu0 %v38
  %209 = vmatprep.subr.mxu0 0.0
  %210 = vmatpush1.msra.mxu0 %v37
  %211 = vmatprep.subr.mxu0 0.0
  %212 = vmatpush1.msra.mxu0 %v36
  %213 = vmatprep.subr.mxu0 0.0
  %214 = vmatpush2.msra.mxu0 0.0
  %215 = vmatprep.subr.mxu0 0.0
  %216 = vmatpush2.msra.mxu0 0.0
  %217 = vmatprep.subr.mxu0 0.0
  %218 = vmatpush2.msra.mxu0 0.0
  %219 = vmatprep.subr.mxu0 0.0
  %220 = vmatpush2.msra.mxu0 0.0
  %221 = vmatprep.subr.mxu0 0.0
  %222 = vmatpush2.msra.mxu0 0.0
  %223 = vmatprep.subr.mxu0 0.0
  %224 = vmatpush2.msra.mxu0 0.0
  %225 = vmatprep.subr.mxu0 0.0
  %226 = vmatpush2.msra.mxu0 0.0
  %227 = vmatprep.subr.mxu0 0.0
  %228 = vmatpush2.msra.mxu0 0.0
  %229 = vmatprep.subr.mxu0 0.0
  %230 = vmatpush2.msra.mxu0 0.0
  %231 = vmatprep.subr.mxu0 0.0
  %232 = vmatpush2.msra.mxu0 0.0
  %233 = vmatprep.subr.mxu0 0.0
  %234 = vmatpush2.msra.mxu0 0.0
  %235 = vmatprep.subr.mxu0 0.0
  %236 = vmatpush2.msra.mxu0 0.0
  %237 = vmatprep.subr.mxu0 0.0
  %238 = vmatpush2.msra.mxu0 0.0
  %239 = vmatprep.subr.mxu0 0.0
  %240 = vmatpush2.msra.mxu0 0.0
  %241 = vmatprep.subr.mxu0 0.0
  %242 = vmatpush2.msra.mxu0 0.0
  %243 = vmatprep.subr.mxu0 0.0
  %244 = vmatpush2.msra.mxu0 0.0
  %245 = vmatprep.mubr.f32.mxu0 0.0
  %246 = vmatmul.mubr.f32.gmra.mxu0 %v18
  %v247 = vpop.f32.mrf.mxu0
  %v248 = vadd.f32 %v180, %v247
  %v249 = vpop.f32.mrf.mxu0
  %250 = vmatprep.mubr.f32.mxu0 0.0
  %251 = vmatmul.mubr.f32.gmra.mxu0 %v19
  %v252 = vpop.f32.mrf.mxu0
  %v253 = vadd.f32 %v180, %v252
  %v254 = vpop.f32.mrf.mxu0
  %255 = vdwg.mxu0
  %v256 = vmul.f32 %v248, %v248
  %v257 = vmul.f32 %v253, %v253
  %v258 = vmul.f32 %v248, %v256
  %v259 = vmul.f32 %v253, %v257
  %v260 = vmul.f32 %v258, 0.044715
  %v261 = vmul.f32 %v259, 0.044715
  %v262 = vadd.f32 %v248, %v260
  %v263 = vadd.f32 %v253, %v261
  %v264 = vmul.f32 %v262, 0.7978846
  %v265 = vmul.f32 %v263, 0.7978846
  %v266 = vtanh.pop %v264
  %v267 = vtanh.pop %v265
  %v268 = vadd.f32 %v266, 1.0
  %v269 = vadd.f32 %v267, 1.0
  %v270 = vmul.f32 %v268, 0.5
  %v271 = vmul.f32 %v269, 0.5
  %v272 = vmul.f32 %v248, %v270
  %v273 = vmul.f32 %v253, %v271
  %274 = vmatprep.subr.mxu0 0.0
  %275 = vmatpush1.msra.mxu0 %v67
  %276 = vmatprep.subr.mxu0 0.0
  %277 = vmatpush1.msra.mxu0 %v66
  %278 = vmatprep.subr.mxu0 0.0
  %279 = vmatpush1.msra.mxu0 %v65
  %280 = vmatprep.subr.mxu0 0.0
  %281 = vmatpush1.msra.mxu0 %v64
  %282 = vmatprep.subr.mxu0 0.0
  %283 = vmatpush1.msra.mxu0 %v63
  %284 = vmatprep.subr.mxu0 0.0
  %285 = vmatpush1.msra.mxu0 %v62
  %286 = vmatprep.subr.mxu0 0.0
  %287 = vmatpush1.msra.mxu0 %v61
  %288 = vmatprep.subr.mxu0 0.0
  %289 = vmatpush1.msra.mxu0 %v60
  %290 = vmatprep.subr.mxu0 0.0
  %291 = vmatpush1.msra.mxu0 %v59
  %292 = vmatprep.subr.mxu0 0.0
  %293 = vmatpush1.msra.mxu0 %v58
  %294 = vmatprep.subr.mxu0 0.0
  %295 = vmatpush1.msra.mxu0 %v57
  %296 = vmatprep.subr.mxu0 0.0
  %297 = vmatpush1.msra.mxu0 %v56
  %298 = vmatprep.subr.mxu0 0.0
  %299 = vmatpush1.msra.mxu0 %v55
  %300 = vmatprep.subr.mxu0 0.0
  %301 = vmatpush1.msra.mxu0 %v54
  %302 = vmatprep.subr.mxu0 0.0
  %303 = vmatpush1.msra.mxu0 %v53
  %304 = vmatprep.subr.mxu0 0.0
  %305 = vmatpush1.msra.mxu0 %v52
  %306 = vmatprep.subr.mxu0 0.0
  %307 = vmatpush2.msra.mxu0 0.0
  %308 = vmatprep.subr.mxu0 0.0
  %309 = vmatpush2.msra.mxu0 0.0
  %310 = vmatprep.subr.mxu0 0.0
  %311 = vmatpush2.msra.mxu0 0.0
  %312 = vmatprep.subr.mxu0 0.0
  %313 = vmatpush2.msra.mxu0 0.0
  %314 = vmatprep.subr.mxu0 0.0
  %315 = vmatpush2.msra.mxu0 0.0
  %316 = vmatprep.subr.mxu0 0.0
  %317 = vmatpush2.msra.mxu0 0.0
  %318 = vmatprep.subr.mxu0 0.0
  %319 = vmatpush2.msra.mxu0 0.0
  %320 = vmatprep.subr.mxu0 0.0
  %321 = vmatpush2.msra.mxu0 0.0
  %322 = vmatprep.subr.mxu0 0.0
  %323 = vmatpush2.msra.mxu0 0.0
  %324 = vmatprep.subr.mxu0 0.0
  %325 = vmatpush2.msra.mxu0 0.0
  %326 = vmatprep.subr.mxu0 0.0
  %327 = vmatpush2.msra.mxu0 0.0
  %328 = vmatprep.subr.mxu0 0.0
  %329 = vmatpush2.msra.mxu0 0.0
  %330 = vmatprep.subr.mxu0 0.0
  %331 = vmatpush2.msra.mxu0 0.0
  %332 = vmatprep.subr.mxu0 0.0
  %333 = vmatpush2.msra.mxu0 0.0
  %334 = vmatprep.subr.mxu0 0.0
  %335 = vmatpush2.msra.mxu0 0.0
  %336 = vmatprep.subr.mxu0 0.0
  %337 = vmatpush2.msra.mxu0 0.0
  %338 = vmatprep.mubr.f32.mxu0 0.0
  %339 = vmatmul.mubr.f32.gmra.mxu0 %v272
  %v340 = vpop.f32.mrf.mxu0
  %v341 = vadd.f32 0.0, %v340
  %v342 = vpop.f32.mrf.mxu0
  %343 = vmatprep.mubr.f32.mxu0 0.0
  %344 = vmatmul.mubr.f32.gmra.mxu0 %v273
  %v345 = vpop.f32.mrf.mxu0
  %v346 = vadd.f32 0.0, %v345
  %v347 = vpop.f32.mrf.mxu0
  %348 = vdwg.mxu0
  %v349 = vadd.f32 %v18, %v341
  %v350 = vadd.f32 %v19, %v346
  %v351 = vlaneseq
  %v352 = vshrl.u32 %v351, 7
  %v353 = vsub.s32 0, %v352
  %v354 = vrot.slane %v84, %v353
  %v355 = vadd.f32 %v349, %v354
  %v356 = vadd.f32 %v350, %v354
  %357 = vadd.xlane.f32.xlu0 %v355
  %v358 = vpop.xlane.xlu0 %357
  %359 = vadd.xlane.f32.xlu0 %v356
  %v360 = vpop.xlane.xlu0 %359
  %v361 = vmul.f32 %v358, 0.03125
  %v362 = vmul.f32 %v360, 0.03125
  %v363 = vlaneseq
  %v364 = vand.u32 %v363, 127
  %vm365 = vcmp.lt.s32.totalorder %v364, 32
  %v366 = vsub.f32 %v355, %v361
  %v367 = vsub.f32 %v356, %v362
  %v368 = vsel %vm365, %v366, 0.0
  %v369 = vsel %vm365, %v367, 0.0
  %v370 = vmul.f32 %v368, %v368
  %v371 = vmul.f32 %v369, %v369
  %372 = vadd.xlane.f32.xlu0 %v370
  %v373 = vpop.xlane.xlu0 %372
  %374 = vadd.xlane.f32.xlu0 %v371
  %v375 = vpop.xlane.xlu0 %374
  %v376 = vmul.f32 %v373, 0.03125
  %v377 = vmul.f32 %v375, 0.03125
  %v378 = vadd.f32 %v376, 1e-05
  %v379 = vadd.f32 %v377, 1e-05
  %v380 = vrsqrt.pop %v378
  %v381 = vrsqrt.pop %v379
  %v382 = vmul.f32 %v368, %v380
  %v383 = vmul.f32 %v369, %v381
  %v384 = vlaneseq
  %v385 = vshrl.u32 %v384, 7
  %v386 = vsub.s32 0, %v385
  %v387 = vrot.slane %v85, %v386
  %v388 = vmul.f32 %v382, %v387
  %v389 = vmul.f32 %v383, %v387
  %v390 = vlaneseq
  %v391 = vshrl.u32 %v390, 7
  %v392 = vsub.s32 0, %v391
  %v393 = vrot.slane %v86, %v392
  %v394 = vadd.f32 %v388, %v393
  %v395 = vadd.f32 %v389, %v393
  %v396 = vmul.f32 %v394, 0.17677669
  %v397 = vmul.f32 %v395, 0.17677669
  %v398 = vlaneseq
  %v399 = vshrl.u32 %v398, 7
  %v400 = vsub.s32 0, %v399
  %v401 = vrot.slane %v87, %v400
  %402 = vmatprep.subr.mxu0 0.0
  %403 = vmatpush1.xpose.msra.mxu0 %v81
  %404 = vmatprep.subr.mxu0 0.0
  %405 = vmatpush1.xpose.msra.mxu0 %v80
  %406 = vmatprep.subr.mxu0 0.0
  %407 = vmatpush1.xpose.msra.mxu0 %v79
  %408 = vmatprep.subr.mxu0 0.0
  %409 = vmatpush1.xpose.msra.mxu0 %v78
  %410 = vmatprep.subr.mxu0 0.0
  %411 = vmatpush1.xpose.msra.mxu0 %v77
  %412 = vmatprep.subr.mxu0 0.0
  %413 = vmatpush1.xpose.msra.mxu0 %v76
  %414 = vmatprep.subr.mxu0 0.0
  %415 = vmatpush1.xpose.msra.mxu0 %v75
  %416 = vmatprep.subr.mxu0 0.0
  %417 = vmatpush1.xpose.msra.mxu0 %v74
  %418 = vmatprep.subr.mxu0 0.0
  %419 = vmatpush1.xpose.msra.mxu0 %v73
  %420 = vmatprep.subr.mxu0 0.0
  %421 = vmatpush1.xpose.msra.mxu0 %v72
  %422 = vmatprep.subr.mxu0 0.0
  %423 = vmatpush1.xpose.msra.mxu0 %v71
  %424 = vmatprep.subr.mxu0 0.0
  %425 = vmatpush1.xpose.msra.mxu0 %v70
  %426 = vmatprep.subr.mxu0 0.0
  %427 = vmatpush1.xpose.msra.mxu0 %v69
  %428 = vmatprep.subr.mxu0 0.0
  %429 = vmatpush1.xpose.msra.mxu0 %v68
  %430 = vmatprep.subr.mxu0 0.0
  %431 = vmatpush1.xpose.msra.mxu0 %v397
  %432 = vmatprep.subr.mxu0 0.0
  %433 = vmatpush1.xpose.msra.mxu0 %v396
  %434 = vmatprep.subr.mxu0 0.0
  %435 = vmatpush2.xpose.msra.mxu0 0.0
  %436 = vmatprep.subr.mxu0 0.0
  %437 = vmatpush2.xpose.msra.mxu0 0.0
  %438 = vmatprep.subr.mxu0 0.0
  %439 = vmatpush2.xpose.msra.mxu0 0.0
  %440 = vmatprep.subr.mxu0 0.0
  %441 = vmatpush2.xpose.msra.mxu0 0.0
  %442 = vmatprep.subr.mxu0 0.0
  %443 = vmatpush2.xpose.msra.mxu0 0.0
  %444 = vmatprep.subr.mxu0 0.0
  %445 = vmatpush2.xpose.msra.mxu0 0.0
  %446 = vmatprep.subr.mxu0 0.0
  %447 = vmatpush2.xpose.msra.mxu0 0.0
  %448 = vmatprep.subr.mxu0 0.0
  %449 = vmatpush2.xpose.msra.mxu0 0.0
  %450 = vmatprep.subr.mxu0 0.0
  %451 = vmatpush2.xpose.msra.mxu0 0.0
  %452 = vmatprep.subr.mxu0 0.0
  %453 = vmatpush2.xpose.msra.mxu0 0.0
  %454 = vmatprep.subr.mxu0 0.0
  %455 = vmatpush2.xpose.msra.mxu0 0.0
  %456 = vmatprep.subr.mxu0 0.0
  %457 = vmatpush2.xpose.msra.mxu0 0.0
  %458 = vmatprep.subr.mxu0 0.0
  %459 = vmatpush2.xpose.msra.mxu0 0.0
  %460 = vmatprep.subr.mxu0 0.0
  %461 = vmatpush2.xpose.msra.mxu0 0.0
  %462 = vmatprep.subr.mxu0 0.0
  %463 = vmatpush2.xpose.msra.mxu0 0.0
  %464 = vmatprep.subr.mxu0 0.0
  %465 = vmatpush2.xpose.msra.mxu0 0.0
  %466 = vmatprep.mubr.f32.mxu0 0.0
  %467 = vmatmul.mubr.f32.gmra.mxu0 %v159
  %v468 = vpop.f32.mrf.mxu0
  %v469 = vadd.f32 %v401, %v468
  %v470 = vpop.f32.mrf.mxu0
  %471 = vmatprep.mubr.f32.mxu0 0.0
  %472 = vmatmul.mubr.f32.gmra.mxu0 %v164
  %v473 = vpop.f32.mrf.mxu0
  %v474 = vadd.f32 %v401, %v473
  %v475 = vpop.f32.mrf.mxu0
  %476 = vmatprep.mubr.f32.mxu0 0.0
  %477 = vmatmul.mubr.f32.gmra.mxu0 %v169
  %v478 = vpop.f32.mrf.mxu0
  %v479 = vadd.f32 %v401, %v478
  %v480 = vpop.f32.mrf.mxu0
  %481 = vmatprep.mubr.f32.mxu0 0.0
  %482 = vmatmul.mubr.f32.gmra.mxu0 %v174
  %v483 = vpop.f32.mrf.mxu0
  %v484 = vadd.f32 %v401, %v483
  %v485 = vpop.f32.mrf.mxu0
  %486 = vdwg.mxu0
  %487 = vst [vmem:[%s3] sm:$0xff] %v159
  %488 = vst [vmem:[%s3 + $0x8] sm:$0xff] %v164
  %489 = vst [vmem:[%s3 + $0x10] sm:$0xff] %v169
  %490 = vst [vmem:[%s3 + $0x18] sm:$0xff] %v174
  %491 = vst [vmem:[%s3 + $0x20] sm:$0xff] %v394
  %492 = vst [vmem:[%s3 + $0x28] sm:$0xff] %v395
  %493 = vst [vmem:[%s3 + $0x30] sm:$0xff] %v469
  %494 = vst [vmem:[%s3 + $0x38] sm:$0xff] %v474
  %495 = vst [vmem:[%s3 + $0x40] sm:$0xff] %v479
  %496 = vst [vmem:[%s3 + $0x48] sm:$0xff] %v484
  // Predicated region
  $region14: #{glip_forward.1} parent=0 // pred_check
    _
  $region15: #{glip_forward.1} parent=0 // pred_check_branch
    %498 = sbr.rel (0) target = $region17
  $region16: #{glip_forward.1} parent=0 // pred_region
    _
  $region17: #{glip_forward.1} parent=0 // pred_fallthru
    _
  // Predicated region
  $region18: #{glip_forward.1} parent=0 // pred_check
    _
  $region19: #{glip_forward.1} parent=0 // pred_check_branch
    %500 = sbr.rel (0) target = $region21
  $region20: #{glip_forward.1} parent=0 // pred_region
    _
  $region21: #{glip_forward.1} parent=0 // pred_fallthru
    _

</llo_original>
